<compile_context>
chip_gen: v7x
topology: tpu7x:2x2x1
jax: 0.10.0
libtpu: 0.0.40
codegen_flags: <defaults>
</compile_context>

<pallas_src>
import math

import jax
import jax.numpy as jnp
from jax import lax
from jax.experimental import pallas as pl
from jax.experimental.pallas import tpu as pltpu


def get_qrange(signed, n_bits):
    if signed:
        return -(2 ** (n_bits - 1)), 2 ** (n_bits - 1) - 1
    return 0, 2 ** n_bits - 1


def _round_up(x, m):
    return (x + m - 1) // m * m


# ---------------------------------------------------------------------------
# Kernel 1: weight quantization (clip -> floor -> phi -> sgn -> dequantize).
# The weight is tiny, so it lives in a single VMEM block; the global max/min
# needed by sgn() is computed in-kernel. s = 1/(1-alpha) and
# k = log(2/alpha - 1)/delta are precomputed in the wrapper (review item).
# Quantized directly in (K, C_out) = (kh*kw*C_in, C_out) layout.
# ---------------------------------------------------------------------------
def _wt_quant_kernel(scal_ref, w_ref, wq_ref):
    lower = scal_ref[0]
    upper = scal_ref[1]
    delta = scal_ref[2]
    s = scal_ref[3]          # 1 / (1 - alpha), hoisted
    k = scal_ref[4]          # log(2/alpha - 1) / delta, hoisted

    w = w_ref[...]
    wq = jnp.clip(w, lower, upper)                       # clipping(w, upper, lower)
    interval = jnp.floor((wq - lower) / delta)           # floor_pass(...)
    mi = (interval + 0.5) * delta + lower
    phi = jnp.tanh((wq - mi) * k) * s                    # torch_phi_function(...)

    d = jnp.max(phi) - jnp.min(phi)                      # sgn(...) forward
    d = jnp.where(d == 0.0, 1.0, d)                      # guard constant weights
    y = jnp.round(phi / d + 0.5) * 2.0 - 1.0

    wq_ref[...] = ((y + 1.0) * 0.5 + interval) * delta + lower   # dequantize(...)


def quantize_weight_kc(w_kc, lower, upper, delta, s, k):
    scal = jnp.stack([lower, upper, delta, s, k]).astype(jnp.float32)
    return pl.pallas_call(
        _wt_quant_kernel,
        out_shape=jax.ShapeDtypeStruct(w_kc.shape, jnp.float32),
        in_specs=[
            pl.BlockSpec(memory_space=pltpu.MemorySpace.SMEM),
            pl.BlockSpec(memory_space=pltpu.MemorySpace.VMEM),
        ],
        out_specs=pl.BlockSpec(memory_space=pltpu.MemorySpace.VMEM),
    )(scal, w_kc)


# ---------------------------------------------------------------------------
# Kernel 2: fused input quantization + 3x3 conv (tap-packed single MXU dot)
# + bias. Grid = (N, C_out_tiles). Per image (j == 0) the quantized integer
# codes are computed once and packed into a VMEM patch matrix of shape
# (H*W, Kp) with Kp = round_up(9*C_in, 16); every C_out tile then does one
# bf16xbf16 -> f32 dot against the resident packed weight.
# ---------------------------------------------------------------------------
def _conv_quant_kernel(scal_ref, x_ref, w_ref, b_ref, o_ref, p_ref):
    _, H, W, tn = o_ref.shape
    _, Hp2, Wp2, c_in = x_ref.shape
    Kp = p_ref.shape[1]
    k_real = 9 * c_in

    inv_scale = scal_ref[0]
    scale = scal_ref[1]
    upper = scal_ref[2]
    j = pl.program_id(1)

    @pl.when(j == 0)
    def _build_patches():
        # Quantize ONCE per image: clip -> integer codes -> single bf16 cast.
        # (codes are small integers, exact in bf16; the scale is applied to
        #  the f32 accumulator instead of per input element.)
        x = x_ref[0]                                      # (Hp2, Wp2, c_in) f32
        xq = jnp.clip(x, 0.0, upper)                      # clipping(input, upper, 0)
        codes = jnp.round(xq * inv_scale).astype(jnp.bfloat16)  # round_pass(x/scale)
        # Pack the 9 shifted taps along the contraction dim (tap-major,
        # channel-minor), matching the packed weight layout.
        for dh in range(3):
            for dw in range(3):
                t = dh * 3 + dw
                p_ref[:, t * c_in:(t + 1) * c_in] = (
                    codes[dh:dh + H, dw:dw + W, :].reshape(H * W, c_in))
        if Kp > k_real:                                   # zero the K padding lanes
            p_ref[:, k_real:] = jnp.zeros((H * W, Kp - k_real), jnp.bfloat16)

    # One MXU dot per (image, C_out tile); weight/bias are fully resident and
    # indexed along their leading (tile) dim.
    acc = jnp.dot(p_ref[...], w_ref[j], preferred_element_type=jnp.float32)
    out = acc * scale + b_ref[j]                          # (H*W, tn) + (1, tn)
    o_ref[0] = out.reshape(H, W, tn)


def _conv_vmem_limit(Hp2, Wp2, c_in, H, W, tn, Kp, cp_out, J):
    # Footprints use Mosaic's native (8, 128) padding on the last two dims
    # (the unpadded-c_in input block is lane-padded to 128 once in VMEM).
    xblk = Hp2 * _round_up(Wp2, 8) * _round_up(c_in, 128) * 4
    oblk = H * _round_up(W, 8) * tn * 4
    wblk = J * _round_up(Kp, 16) * tn * 2
    bblk = J * 8 * tn * 4
    scr = _round_up(H * W, 16) * _round_up(Kp, 128) * 2
    acc = _round_up(H * W, 8) * tn * 4
    need = 2 * (xblk + oblk) + 2 * (wblk + bblk) + scr + 4 * acc
    # 2x headroom, floor 16 MiB, capped below v5e/v6e physical VMEM.
    return int(min(max(2 * need, 16 * 1024 * 1024), 112 * 1024 * 1024))


def fused_quant_conv3x3(x_pad, w_packed, bias_p, inv_scale, scale, upper):
    """x_pad: (N, H+2, W+2, C_in) f32 (unpadded channels, spatial halo of 1);
    w_packed: (J, Kp, tn) bf16; bias_p: (J, 1, tn) f32."""
    N, Hp2, Wp2, c_in = x_pad.shape
    H, W = Hp2 - 2, Wp2 - 2
    J, Kp, tn = w_packed.shape
    cp_out = J * tn
    scal = jnp.stack([inv_scale, scale, upper]).astype(jnp.float32)

    return pl.pallas_call(
        _conv_quant_kernel,
        out_shape=jax.ShapeDtypeStruct((N, H, W, cp_out), jnp.float32),
        grid=(N, J),
        in_specs=[
            pl.BlockSpec(memory_space=pltpu.MemorySpace.SMEM),             # scalars
            pl.BlockSpec((1, Hp2, Wp2, c_in), lambda n, j: (n, 0, 0, 0)),  # image
            pl.BlockSpec((J, Kp, tn), lambda n, j: (0, 0, 0)),             # resident W
            pl.BlockSpec((J, 1, tn), lambda n, j: (0, 0, 0)),              # resident b
        ],
        out_specs=pl.BlockSpec((1, H, W, tn), lambda n, j: (n, 0, 0, j)),
        scratch_shapes=[pltpu.VMEM((H * W, Kp), jnp.bfloat16)],            # patch cache
        compiler_params=pltpu.CompilerParams(
            # j is "arbitrary": the patch scratch built at j==0 is reused by
            # the later C_out tiles of the same image; n stays "parallel"
            # (each core's inner j loop still starts at 0).
            dimension_semantics=("parallel", "arbitrary"),
            vmem_limit_bytes=_conv_vmem_limit(Hp2, Wp2, c_in, H, W, tn, Kp,
                                              cp_out, J)),
    )(scal, x_pad, w_packed, bias_p)


# ---------------------------------------------------------------------------
# RootQBase.forward equivalent (eval mode, first call: both init_state == 0,
# both quantizers enabled). Scalar state initialization (min/max, abs-mean) is
# done as cheap JAX reductions in the wrapper.
# TODO(synk): training-mode EMA/momentum buffer mutation, init_state flips and
#             the STE backward are stateful/autograd concerns with no effect on
#             the forward values computed here.
# ---------------------------------------------------------------------------
def rootq_conv2d_forward(x, weight, bias, wt_alpha, qconfig, tn=None):
    in_min, in_max = get_qrange(
        qconfig['input']['args']['signed'], qconfig['input']['args']['n_bits'])
    wt_min, wt_max = get_qrange(
        qconfig['weight']['args']['signed'], qconfig['weight']['args']['n_bits'])

    x = x.astype(jnp.float32)
    weight = weight.astype(jnp.float32)
    bias = bias.astype(jnp.float32)

    # --- input quantizer scalars (init_state == 0 path, then eval branch) ---
    in_scale = (jnp.max(x) - jnp.min(x)) / (in_max - in_min)
    in_upper = in_scale * (in_max - in_min)
    # Guard constant input (in_scale == 0): quantized input becomes all zeros
    # instead of NaN (torch would divide by zero here).
    safe = in_scale > 0
    inv_scale = jnp.where(safe, 1.0 / jnp.where(safe, in_scale, 1.0), 0.0)
    # NOTE: multiply-by-1/scale matches the in-repo reference; at exact ties it
    # can differ by one quantization level from a literal divide-by-scale.

    # --- weight quantizer scalars (init_state == 0 path, then eval branch) ---
    wt_upper = 2.0 * jnp.mean(jnp.abs(weight)) * math.sqrt(wt_max)
    wt_lower = -wt_upper
    delta = (wt_upper - wt_lower) / (wt_max - wt_min)
    alpha = jnp.asarray(wt_alpha, jnp.float32)
    s = 1.0 / (1.0 - alpha)                         # hoisted out of the kernel
    k = jnp.log(2.0 / alpha - 1.0) / delta          # hoisted out of the kernel

    c_out, c_in, kh, kw = weight.shape
    assert (kh, kw) == (3, 3), "this instantiation fuses a 3x3 / s1 / p1 conv"
    if tn is None:
        # 256-wide C_out tiles fill the v6e/v7x 256x256 MXU when possible.
        # TODO(synk): keep tn=128 on v5e (128x128 MXU) even if c_out % 256 == 0.
        tn = 256 if c_out % 256 == 0 else 128
    cp_out = _round_up(c_out, tn)
    J = cp_out // tn
    k_real = kh * kw * c_in
    Kp = _round_up(k_real, 16)                      # bf16 sublane-aligned K

    # Quantize the weight directly in (K, C_out) layout (quantization is
    # elementwise + a layout-invariant global max/min, so this is exact),
    # then pad with exact zeros and pack as (J, Kp, tn) bf16 so the kernel can
    # keep it fully resident and index C_out tiles along the leading dim.
    w_kc = jnp.transpose(weight, (2, 3, 1, 0)).reshape(k_real, c_out)
    wq_kc = quantize_weight_kc(w_kc, wt_lower, wt_upper, delta, s, k)
    wq_pad = jnp.pad(wq_kc, ((0, Kp - k_real), (0, cp_out - c_out)))
    w_packed = jnp.transpose(wq_pad.reshape(Kp, J, tn), (1, 0, 2)).astype(jnp.bfloat16)

    bias_p = jnp.pad(bias, (0, cp_out - c_out)).reshape(J, 1, tn)

    # Input stays at its true channel count in HBM (no 32x channel-pad DMA);
    # only the spatial halo of 1 is added (exact zeros -> quantize to 0).
    N, _, H, W = x.shape
    x_nhwc = jnp.transpose(x, (0, 2, 3, 1))
    x_pad = jnp.pad(x_nhwc, ((0, 0), (1, 1), (1, 1), (0, 0)))

    out = fused_quant_conv3x3(x_pad, w_packed, bias_p, inv_scale, in_scale, in_upper)
    out = out[..., :c_out]                          # drop padded channels
    return jnp.transpose(out, (0, 3, 1, 2))         # back to NCHW


# ---------------------------------------------------------------------------
# Pure-JAX reference (same math, XLA conv) used for correctness checks.
# bf16_operands=True mirrors the kernel exactly: integer codes in bf16, bf16
# weights, f32 accumulation, scale applied to the f32 accumulator.
# ---------------------------------------------------------------------------
def rootq_conv2d_reference(x, weight, bias, wt_alpha, qconfig, bf16_operands=True):
    in_min, in_max = get_qrange(
        qconfig['input']['args']['signed'], qconfig['input']['args']['n_bits'])
    wt_min, wt_max = get_qrange(
        qconfig['weight']['args']['signed'], qconfig['weight']['args']['n_bits'])

    x = x.astype(jnp.float32)
    weight = weight.astype(jnp.float32)

    in_scale = (jnp.max(x) - jnp.min(x)) / (in_max - in_min)
    in_upper = in_scale * (in_max - in_min)
    safe = in_scale > 0
    inv_scale = jnp.where(safe, 1.0 / jnp.where(safe, in_scale, 1.0), 0.0)
    codes = jnp.round(jnp.clip(x, 0.0, in_upper) * inv_scale)   # jnp.round == torch.round (half-even)

    wt_upper = 2.0 * jnp.mean(jnp.abs(weight)) * math.sqrt(wt_max)
    wt_lower = -wt_upper
    delta = (wt_upper - wt_lower) / (wt_max - wt_min)
    wq = jnp.clip(weight, wt_lower, wt_upper)
    interval = jnp.floor((wq - wt_lower) / delta)
    mi = (interval + 0.5) * delta + wt_lower
    alpha = jnp.asarray(wt_alpha, jnp.float32)
    s = 1.0 / (1.0 - alpha)
    k = jnp.log(2.0 / alpha - 1.0) / delta
    phi = jnp.tanh((wq - mi) * k) * s
    d = jnp.max(phi) - jnp.min(phi)
    d = jnp.where(d == 0.0, 1.0, d)
    y = jnp.round(phi / d + 0.5) * 2.0 - 1.0
    wq = ((y + 1.0) * 0.5 + interval) * delta + wt_lower

    if bf16_operands:
        out = lax.conv_general_dilated(
            codes.astype(jnp.bfloat16), wq.astype(jnp.bfloat16),
            window_strides=(1, 1), padding=((1, 1), (1, 1)),
            dimension_numbers=('NCHW', 'OIHW', 'NCHW'),
            preferred_element_type=jnp.float32) * in_scale
    else:
        out = lax.conv_general_dilated(
            codes * in_scale, wq,
            window_strides=(1, 1), padding=((1, 1), (1, 1)),
            dimension_numbers=('NCHW', 'OIHW', 'NCHW'),
            preferred_element_type=jnp.float32)
    return out + bias.astype(jnp.float32)[None, :, None, None]


if __name__ == "__main__":
    qconfig = {
        'weight': {'enable': True, 'args': {'signed': True, 'n_bits': 4}},
        'input': {'enable': True, 'args': {'signed': False, 'n_bits': 4}},
        'momentum': 0.1,
    }

    key = jax.random.PRNGKey(0)
    kx, kw_, kb = jax.random.split(key, 3)

    N, C_in, H, W = 2, 4, 16, 16
    C_out, KH, KW = 8, 3, 3

    x = jax.random.normal(kx, (N, C_in, H, W), dtype=jnp.float32)
    weight = 0.1 * jax.random.normal(kw_, (C_out, C_in, KH, KW), dtype=jnp.float32)
    bias = 0.01 * jax.random.normal(kb, (C_out,), dtype=jnp.float32)
    wt_alpha = 0.25  # matches torch.nn.Parameter(torch.tensor(1.0 / 4))

    out = jax.block_until_ready(
        rootq_conv2d_forward(x, weight, bias, wt_alpha, qconfig))

    ref_bf16 = jax.block_until_ready(
        rootq_conv2d_reference(x, weight, bias, wt_alpha, qconfig, bf16_operands=True))
    ref_f32 = jax.block_until_ready(
        rootq_conv2d_reference(x, weight, bias, wt_alpha, qconfig, bf16_operands=False))

    assert out.shape == (N, C_out, H, W)
    # Tight check against the matching (bf16-operand, f32-accumulate) reference.
    assert jnp.allclose(out, ref_bf16, rtol=1e-3, atol=1e-3)
    # Loose sanity check against the pure-f32 reference (only the bf16 rounding
    # of the dequantized weights remains, since the integer codes are exact).
    assert jnp.allclose(out, ref_f32, rtol=5e-2, atol=5e-2)

    print("KERNEL_OK")
</pallas_src>

<mosaic_0001>
module attributes {stable_mosaic.version = 11 : i64} {
  func.func @_wt_quant_kernel(%arg0: memref<5xf32, #tpu.memory_space<smem>>, %arg1: memref<36x8xf32, #tpu.memory_space<vmem>>, %arg2: memref<36x8xf32, #tpu.memory_space<vmem>>) attributes {dimension_semantics = [], scalar_prefetch = 0 : i64, scratch_operands = 0 : i64, tpu.core_type = #tpu.core_type<tc>} {
    %c0 = arith.constant 0 : index
    %0 = memref.load %arg0[%c0] : memref<5xf32, #tpu.memory_space<smem>>
    %c1 = arith.constant 1 : index
    %1 = memref.load %arg0[%c1] : memref<5xf32, #tpu.memory_space<smem>>
    %c2 = arith.constant 2 : index
    %2 = memref.load %arg0[%c2] : memref<5xf32, #tpu.memory_space<smem>>
    %c3 = arith.constant 3 : index
    %3 = memref.load %arg0[%c3] : memref<5xf32, #tpu.memory_space<smem>>
    %c4 = arith.constant 4 : index
    %4 = memref.load %arg0[%c4] : memref<5xf32, #tpu.memory_space<smem>>
    %c0_0 = arith.constant 0 : index
    %c0_1 = arith.constant 0 : index
    %5 = vector.load %arg1[%c0_0, %c0_1] : memref<36x8xf32, #tpu.memory_space<vmem>>, vector<36x8xf32>
    %6 = vector.broadcast %0 : f32 to vector<36x8xf32>
    %7 = arith.maximumf %6, %5 : vector<36x8xf32>
    %8 = vector.broadcast %1 : f32 to vector<36x8xf32>
    %9 = arith.minimumf %8, %7 : vector<36x8xf32>
    %10 = vector.broadcast %0 : f32 to vector<36x8xf32>
    %11 = arith.subf %9, %10 : vector<36x8xf32>
    %12 = vector.broadcast %2 : f32 to vector<36x8xf32>
    %13 = arith.divf %11, %12 : vector<36x8xf32>
    %14 = math.floor %13 : vector<36x8xf32>
    %cst = arith.constant 5.000000e-01 : f32
    %15 = vector.broadcast %cst : f32 to vector<36x8xf32>
    %16 = arith.addf %14, %15 : vector<36x8xf32>
    %17 = vector.broadcast %2 : f32 to vector<36x8xf32>
    %18 = arith.mulf %16, %17 : vector<36x8xf32>
    %19 = vector.broadcast %0 : f32 to vector<36x8xf32>
    %20 = arith.addf %18, %19 : vector<36x8xf32>
    %21 = arith.subf %9, %20 : vector<36x8xf32>
    %22 = vector.broadcast %4 : f32 to vector<36x8xf32>
    %23 = arith.mulf %21, %22 : vector<36x8xf32>
    %24 = math.tanh %23 : vector<36x8xf32>
    %25 = vector.broadcast %3 : f32 to vector<36x8xf32>
    %26 = arith.mulf %24, %25 : vector<36x8xf32>
    %27 = vector.shape_cast %26 : vector<36x8xf32> to vector<1x36x8xf32>
    %cst_2 = arith.constant dense<0xFF800000> : vector<1xf32>
    %28 = vector.multi_reduction <maximumf>, %27, %cst_2 [1, 2] : vector<1x36x8xf32> to vector<1xf32>
    %29 = vector.shape_cast %28 : vector<1xf32> to vector<1x1x1xf32>
    %30 = vector.extract %29[0, 0, 0] : f32 from vector<1x1x1xf32>
    %31 = vector.shape_cast %26 : vector<36x8xf32> to vector<1x36x8xf32>
    %cst_3 = arith.constant dense<0x7F800000> : vector<1xf32>
    %32 = vector.multi_reduction <minimumf>, %31, %cst_3 [1, 2] : vector<1x36x8xf32> to vector<1xf32>
    %33 = vector.shape_cast %32 : vector<1xf32> to vector<1x1x1xf32>
    %34 = vector.extract %33[0, 0, 0] : f32 from vector<1x1x1xf32>
    %35 = arith.subf %30, %34 : f32
    %cst_4 = arith.constant 0.000000e+00 : f32
    %36 = arith.cmpf oeq, %35, %cst_4 : f32
    %cst_5 = arith.constant 1.000000e+00 : f32
    %37 = arith.select %36, %cst_5, %35 : f32
    %38 = vector.broadcast %37 : f32 to vector<36x8xf32>
    %39 = arith.divf %26, %38 : vector<36x8xf32>
    %cst_6 = arith.constant 5.000000e-01 : f32
    %40 = vector.broadcast %cst_6 : f32 to vector<36x8xf32>
    %41 = arith.addf %39, %40 : vector<36x8xf32>
    %42 = math.roundeven %41 : vector<36x8xf32>
    %cst_7 = arith.constant 2.000000e+00 : f32
    %43 = vector.broadcast %cst_7 : f32 to vector<36x8xf32>
    %44 = arith.mulf %42, %43 : vector<36x8xf32>
    %cst_8 = arith.constant 1.000000e+00 : f32
    %45 = vector.broadcast %cst_8 : f32 to vector<36x8xf32>
    %46 = arith.subf %44, %45 : vector<36x8xf32>
    %cst_9 = arith.constant 1.000000e+00 : f32
    %47 = vector.broadcast %cst_9 : f32 to vector<36x8xf32>
    %48 = arith.addf %46, %47 : vector<36x8xf32>
    %cst_10 = arith.constant 5.000000e-01 : f32
    %49 = vector.broadcast %cst_10 : f32 to vector<36x8xf32>
    %50 = arith.mulf %48, %49 : vector<36x8xf32>
    %51 = arith.addf %50, %14 : vector<36x8xf32>
    %52 = vector.broadcast %2 : f32 to vector<36x8xf32>
    %53 = arith.mulf %51, %52 : vector<36x8xf32>
    %54 = vector.broadcast %0 : f32 to vector<36x8xf32>
    %55 = arith.addf %53, %54 : vector<36x8xf32>
    %c0_11 = arith.constant 0 : index
    %c0_12 = arith.constant 0 : index
    %56 = vector.load %arg2[%c0_11, %c0_12] : memref<36x8xf32, #tpu.memory_space<vmem>>, vector<36x8xf32>
    tpu.vector_store %arg2[%c0_11, %c0_12], %55 {strides = array<i32>} : memref<36x8xf32, #tpu.memory_space<vmem>>, vector<36x8xf32>,
    return
  }
}

</mosaic_0001>

<llo_original>
// kernel: tpu_custom_call.1
$region0: #{tpu_custom_call.1}
  #allocation0 [shape = 'u32[]', space=smem, size = 0x4, offset = 0x4, fixed_abs, tag = 'smem constant byte address 0x4 - core index']
  #allocation1 [shape = 'u32[144,128]{1,0:T(1,128)}', space=vmem, size = 0x12000, scoped, tag = 'internal scratch']
  %s0 = inlined_call_operand.vmem [shape: f32[5], index: 0, kind: input, shape index: {}]
  %s1 = inlined_call_operand.vmem [shape: f32[36,8], index: 1, kind: input, shape index: {}]
  %s2 = inlined_call_operand.vmem [shape: f32[36,8], index: 2, kind: output, shape index: {}]
  %s3 = sld [smem:[#allocation0]]
  $region22: #{tpu_custom_call.1} parent=0
    _
  %s5 = ssub.s32 1, %s3
  %s6 = scalar_select 0, %s5, %s3
  $region1: #{tpu_custom_call.1} parent=0
    #allocation2 [shape = 'u8[512]{0}', space=smem, size = 0x200, scoped, tag = 'input window, operand 0, single buffered']
    #allocation3 [shape = 's32[1]{0}', space=sflag, size = 0x4, scoped, tag = 'scoped memory for tpu_custom_call.1']
    %7 = vsyncpa [#allocation3], 0
    // Predicated region
    $region2: #{tpu_custom_call.1} parent=1 // pred_check
      _
    $region3: #{tpu_custom_call.1} parent=1 // pred_check_branch
      %9 = sbr.rel (0) target = $region5
    $region4: #{tpu_custom_call.1} parent=1 // pred_region
      %s11 = ssub.s32 16, 16
      %12 = vsyncadd [#allocation3], %s11
      %s14 = sshll.u32 %s0, 4
      %s15 = int_to_ptr.vmem [resolvable:$true] %s14
      %17 = dma.vmem_to_smem %s15, 16, [#allocation2], [#allocation3]
    $region5: #{tpu_custom_call.1} parent=1 // pred_fallthru
      _
    // Predicated region
    $region6: #{tpu_custom_call.1} parent=1 // pred_check
      _
    $region7: #{tpu_custom_call.1} parent=1 // pred_check_branch
      %19 = sbr.rel (0) target = $region9
    $region8: #{tpu_custom_call.1} parent=1 // pred_region
      _
    $region9: #{tpu_custom_call.1} parent=1 // pred_fallthru
      _
    // Predicated region
    $region10: #{tpu_custom_call.1} parent=1 // pred_check
      _
    $region11: #{tpu_custom_call.1} parent=1 // pred_check_branch
      %21 = sbr.rel (0) target = $region13
    $region12: #{tpu_custom_call.1} parent=1 // pred_region
      %22 = dma.done [#allocation3], 16
    $region13: #{tpu_custom_call.1} parent=1 // pred_fallthru
      _
    %23 = sfence
    %s24 = sld [smem:[#allocation2]]
    %s25 = sld [smem:[#allocation2 + $0x1]]
    %s26 = sld [smem:[#allocation2 + $0x2]]
    %s27 = sld [smem:[#allocation2 + $0x3]]
    %s28 = sld [smem:[#allocation2 + $0x4]]
    %v29 = vld [vmem:[%s1] sm:$0xff]
    %v30 = vld [vmem:[%s1 + $0x8] sm:$0xff]
    %v31 = vld [vmem:[%s1 + $0x10] sm:$0xff]
    %v32 = vld [vmem:[%s1 + $0x18] sm:$0xff]
    %v33 = vld [vmem:[%s1 + $0x20] sm:$0xf]
    %v34 = vstv %s24
    %v35 = vmax.f32 %v34, %v29
    %v36 = vmax.f32 %v34, %v30
    %v37 = vmax.f32 %v34, %v31
    %v38 = vmax.f32 %v34, %v32
    %v39 = vmax.f32 %v34, %v33
    %v40 = vstv %s25
    %v41 = vmin.f32 %v40, %v35
    %v42 = vmin.f32 %v40, %v36
    %v43 = vmin.f32 %v40, %v37
    %v44 = vmin.f32 %v40, %v38
    %v45 = vmin.f32 %v40, %v39
    %v46 = vsub.f32 %v41, %v34
    %v47 = vsub.f32 %v42, %v34
    %v48 = vsub.f32 %v43, %v34
    %v49 = vsub.f32 %v44, %v34
    %v50 = vsub.f32 %v45, %v34
    %v51 = vstv %s26
    %v52 = vrcp.pop %v51
    %v53 = vmul.f32 %v46, %v52
    %v54 = vmul.f32 %v47, %v52
    %v55 = vmul.f32 %v48, %v52
    %v56 = vmul.f32 %v49, %v52
    %v57 = vmul.f32 %v50, %v52
    %v58 = vfloor.f32 %v53
    %v59 = vfloor.f32 %v54
    %v60 = vfloor.f32 %v55
    %v61 = vfloor.f32 %v56
    %v62 = vfloor.f32 %v57
    %v63 = vadd.f32 %v58, 0.5
    %v64 = vadd.f32 %v59, 0.5
    %v65 = vadd.f32 %v60, 0.5
    %v66 = vadd.f32 %v61, 0.5
    %v67 = vadd.f32 %v62, 0.5
    %v68 = vmul.f32 %v63, %v51
    %v69 = vmul.f32 %v64, %v51
    %v70 = vmul.f32 %v65, %v51
    %v71 = vmul.f32 %v66, %v51
    %v72 = vmul.f32 %v67, %v51
    %v73 = vadd.f32 %v68, %v34
    %v74 = vadd.f32 %v69, %v34
    %v75 = vadd.f32 %v70, %v34
    %v76 = vadd.f32 %v71, %v34
    %v77 = vadd.f32 %v72, %v34
    %v78 = vsub.f32 %v41, %v73
    %v79 = vsub.f32 %v42, %v74
    %v80 = vsub.f32 %v43, %v75
    %v81 = vsub.f32 %v44, %v76
    %v82 = vsub.f32 %v45, %v77
    %v83 = vstv %s28
    %v84 = vmul.f32 %v78, %v83
    %v85 = vmul.f32 %v79, %v83
    %v86 = vmul.f32 %v80, %v83
    %v87 = vmul.f32 %v81, %v83
    %v88 = vmul.f32 %v82, %v83
    %v89 = vtanh.pop %v84
    %v90 = vtanh.pop %v85
    %v91 = vtanh.pop %v86
    %v92 = vtanh.pop %v87
    %v93 = vtanh.pop %v88
    %v94 = vstv %s27
    %v95 = vmul.f32 %v89, %v94
    %v96 = vmul.f32 %v90, %v94
    %v97 = vmul.f32 %v91, %v94
    %v98 = vmul.f32 %v92, %v94
    %v99 = vmul.f32 %v93, %v94
    %vm100 = vcmask 64512
    %v101 = vsel %vm100, %v95, -inf
    %v102 = vsel %vm100, %v96, -inf
    %v103 = vsel %vm100, %v97, -inf
    %v104 = vsel %vm100, %v98, -inf
    %vm105 = vcmask 60416
    %v106 = vsel %vm105, %v99, -inf
    %v107 = vmax.f32 %v101, %v106
    %v108 = vmax.f32 %v107, %v102
    %v109 = vmax.f32 %v103, %v104
    %v110 = vmax.f32 %v108, %v109
    %111 = vmax.xlane.f32.xlu0 %v110
    %v112 = vpop.xlane.xlu0 %111
    %v113 = vrot.slane %v112, 4
    %v114 = vmax.f32 %v112, %v113
    %v115 = vrot.slane %v114, 2
    %v116 = vmax.f32 %v114, %v115
    %v117 = vrot.slane %v116, 1
    %v118 = vmax.f32 %v116, %v117
    %s119 = vtos %v118
    %v120 = vsel %vm100, %v95, inf
    %v121 = vsel %vm100, %v96, inf
    %v122 = vsel %vm100, %v97, inf
    %v123 = vsel %vm100, %v98, inf
    %v124 = vsel %vm105, %v99, inf
    %v125 = vmin.f32 %v120, %v124
    %v126 = vmin.f32 %v125, %v121
    %v127 = vmin.f32 %v122, %v123
    %v128 = vmin.f32 %v126, %v127
    %129 = vmin.xlane.f32.xlu0 %v128
    %v130 = vpop.xlane.xlu0 %129
    %v131 = vrot.slane %v130, 4
    %v132 = vmin.f32 %v130, %v131
    %v133 = vrot.slane %v132, 2
    %v134 = vmin.f32 %v132, %v133
    %v135 = vrot.slane %v134, 1
    %v136 = vmin.f32 %v134, %v135
    %s137 = vtos %v136
    %s138 = ssub.f32 %s119, %s137
    %p139 = scmp.eq.f32.partialorder %s138, 0.0
    %s140 = scalar_select %p139, 1.0, %s138
    %v141 = vstv %s140
    %v142 = vrcp.pop %v141
    %v143 = vmul.f32 %v95, %v142
    %v144 = vmul.f32 %v96, %v142
    %v145 = vmul.f32 %v97, %v142
    %v146 = vmul.f32 %v98, %v142
    %v147 = vmul.f32 %v99, %v142
    %v148 = vadd.f32 %v143, 0.5
    %v149 = vadd.f32 %v144, 0.5
    %v150 = vadd.f32 %v145, 0.5
    %v151 = vadd.f32 %v146, 0.5
    %v152 = vadd.f32 %v147, 0.5
    %v153 = vround.ne.pseudo %v148
    %v154 = vround.ne.pseudo %v149
    %v155 = vround.ne.pseudo %v150
    %v156 = vround.ne.pseudo %v151
    %v157 = vround.ne.pseudo %v152
    %v158 = vmul.f32 %v153, 2.0
    %v159 = vmul.f32 %v154, 2.0
    %v160 = vmul.f32 %v155, 2.0
    %v161 = vmul.f32 %v156, 2.0
    %v162 = vmul.f32 %v157, 2.0
    %v163 = vsub.f32 %v158, 1.0
    %v164 = vsub.f32 %v159, 1.0
    %v165 = vsub.f32 %v160, 1.0
    %v166 = vsub.f32 %v161, 1.0
    %v167 = vsub.f32 %v162, 1.0
    %v168 = vadd.f32 %v163, 1.0
    %v169 = vadd.f32 %v164, 1.0
    %v170 = vadd.f32 %v165, 1.0
    %v171 = vadd.f32 %v166, 1.0
    %v172 = vadd.f32 %v167, 1.0
    %v173 = vmul.f32 %v168, 0.5
    %v174 = vmul.f32 %v169, 0.5
    %v175 = vmul.f32 %v170, 0.5
    %v176 = vmul.f32 %v171, 0.5
    %v177 = vmul.f32 %v172, 0.5
    %v178 = vadd.f32 %v173, %v58
    %v179 = vadd.f32 %v174, %v59
    %v180 = vadd.f32 %v175, %v60
    %v181 = vadd.f32 %v176, %v61
    %v182 = vadd.f32 %v177, %v62
    %v183 = vmul.f32 %v178, %v51
    %v184 = vmul.f32 %v179, %v51
    %v185 = vmul.f32 %v180, %v51
    %v186 = vmul.f32 %v181, %v51
    %v187 = vmul.f32 %v182, %v51
    %v188 = vadd.f32 %v183, %v34
    %v189 = vadd.f32 %v184, %v34
    %v190 = vadd.f32 %v185, %v34
    %v191 = vadd.f32 %v186, %v34
    %v192 = vadd.f32 %v187, %v34
    %193 = vst.msk [vmem:[%s2] sm:$0xff] %vm100, %v188
    %194 = vst.msk [vmem:[%s2 + $0x8] sm:$0xff] %vm100, %v189
    %195 = vst.msk [vmem:[%s2 + $0x10] sm:$0xff] %vm100, %v190
    %196 = vst.msk [vmem:[%s2 + $0x18] sm:$0xff] %vm100, %v191
    %197 = vst.msk [vmem:[%s2 + $0x20] sm:$0xf] %vm105, %v192
    // Predicated region
    $region14: #{tpu_custom_call.1} parent=1 // pred_check
      _
    $region15: #{tpu_custom_call.1} parent=1 // pred_check_branch
      %199 = sbr.rel (0) target = $region17
    $region16: #{tpu_custom_call.1} parent=1 // pred_region
      _
    $region17: #{tpu_custom_call.1} parent=1 // pred_fallthru
      _
    // Predicated region
    $region18: #{tpu_custom_call.1} parent=1 // pred_check
      _
    $region19: #{tpu_custom_call.1} parent=1 // pred_check_branch
      %201 = sbr.rel (0) target = $region21
    $region20: #{tpu_custom_call.1} parent=1 // pred_region
      _
    $region21: #{tpu_custom_call.1} parent=1 // pred_fallthru
      _
    %202 = vsyncpa [#allocation3], 1

</llo_original>
